<compile_context>
chip_gen: v5e
topology: v5e:2x2
jax: 0.10.0
libtpu: 0.0.40
codegen_flags: <defaults>
</compile_context>

<pallas_src>
from functools import partial

import jax
import jax.numpy as jnp
from jax import lax
from jax.experimental import pallas as pl
from jax.experimental.pallas import tpu as pltpu


def _round_up(v, m):
    return ((v + m - 1) // m) * m


def _gcn_scan_kernel(a_ref, dinv_ref, xw_ref, pat_ref, b1_ref, w2_ref, out_ref,
                     *, block_rows, blocks_per_split):
    """Grid = (core_split [parallel], row_block [arbitrary/reduction into out_ref])."""
    s = pl.program_id(0)
    j = pl.program_id(1)

    @pl.when(j == 0)
    def _init():
        out_ref[...] = jnp.zeros_like(out_ref)

    # Node-row offset of this block inside the padded row dimension (for the resident PA^T).
    start = pl.multiple_of((s * blocks_per_split + j) * block_rows, block_rows)

    # conv1 on this row block:  h1 = relu( dinv_row * (A01[blk,:] @ (dinv ⊙ X W1)) + b1 ).
    # A01 arrives as int8 (binary); upconvert to bf16 on the VPU right at the MXU boundary.
    a_blk = a_ref[...].astype(jnp.bfloat16)
    z = jnp.dot(a_blk, xw_ref[...], preferred_element_type=jnp.float32)
    h1 = jnp.maximum(z * dinv_ref[...] + b1_ref[...], 0.0)

    # conv2 linear part on the block (bf16 MXU, f32 accumulate).
    hw2 = jnp.dot(h1.astype(jnp.bfloat16), w2_ref[...], preferred_element_type=jnp.float32)

    # Fused mean-pool: out[s] += PA^T[blk,:]^T @ (H1 W2)   (contract the node dimension).
    pat_blk = pat_ref[pl.ds(start, block_rows), :]
    out_ref[...] += lax.dot_general(
        pat_blk, hw2.astype(jnp.bfloat16),
        dimension_numbers=(((0,), (0,)), ((), ())),
        preferred_element_type=jnp.float32)


def build_graph_operators(edge_index, batch, num_nodes, num_graphs, *,
                          block_rows=None, want_core_split=2):
    """One-time (per graph batch) O(N^2) operator construction — keep out of the hot path."""
    n = int(num_nodes)
    g = int(num_graphs)
    lane = 128
    n_cols_pad = max(lane, _round_up(n, lane))

    if block_rows is None:
        # Keep one int8 A block <= ~8 MiB so double buffering fits every generation's VMEM.
        cap = 1024
        try:
            if pltpu.get_tpu_info().vmem_capacity_bytes <= 96 * 2**20:
                cap = 512                      # v7x: 64 MiB physical VMEM -> smaller row blocks
        except Exception:
            pass
        by_budget = (8 * 2**20) // n_cols_pad
        block_rows = int(max(32, min(cap, (by_budget // 32) * 32)))
    block_rows = int(min(block_rows, _round_up(n, 32)))   # 32 = int8 sublane tile

    nb = -(-n // block_rows)
    n_split = want_core_split if nb >= want_core_split else 1   # v7x: 2 TensorCores
    blocks_per_split = -(-nb // n_split)
    n_rows_pad = n_split * blocks_per_split * block_rows
    g_pad = max(8, _round_up(g, 8))

    src = edge_index[0].astype(jnp.int32)
    dst = edge_index[1].astype(jnp.int32)

    # Binary A01 = A + I, built directly padded & int8 (single N^2-byte write).
    a01 = jnp.zeros((n_rows_pad, n_cols_pad), jnp.int8)
    a01 = a01.at[dst, src].set(1)
    a01 = a01.at[jnp.arange(n), jnp.arange(n)].set(1)

    # Degrees / D^-1/2 (kept factored; the kernel streams binary A01).
    deg = jnp.sum(a01, axis=1, dtype=jnp.int32)[:n].astype(jnp.float32)
    dinv = jnp.where(deg > 0, lax.rsqrt(deg), 0.0)                        # (n,)

    # Mean-pool fused into conv2:  PA = P @ A_norm  (rows of P sum to 1).
    counts = jnp.zeros((g,), jnp.float32).at[batch].add(1.0)
    w_rows = dinv / jnp.maximum(counts, 1.0)[batch]                       # (n,)
    pa = jax.ops.segment_sum(a01[:n, :n] * w_rows[:, None], batch, num_segments=g)
    pa = pa * dinv[None, :]                                               # (g, n)

    pat = jnp.zeros((n_rows_pad, g_pad), jnp.bfloat16).at[:n, :g].set(pa.T.astype(jnp.bfloat16))
    dinv_rows = jnp.zeros((n_rows_pad, 1), jnp.float32).at[:n, 0].set(dinv)

    return dict(a01=a01, pat=pat, dinv_rows=dinv_rows, dinv_nodes=dinv,
                num_nodes=n, num_graphs=g, g_pad=g_pad,
                block_rows=block_rows, n_split=n_split,
                blocks_per_split=blocks_per_split,
                n_rows_pad=n_rows_pad, n_cols_pad=n_cols_pad)


def gcn_forward(x, params, ops):
    """Hot path: StandardScaler + one XLA X@W1 + fused Pallas A-scan + tiny XLA finalize."""
    w1, b1, w2, b2, wl, bl = params
    n, _ = x.shape
    hidden = int(w1.shape[1])
    out_feats = int(w2.shape[1])
    assert n == ops["num_nodes"]
    # Torch-module quirk: lin = Linear(hidden_feats, out_feats) is applied to the conv2 output
    # (out_feats columns), so the model only type-checks when hidden_feats == out_feats.
    assert int(wl.shape[0]) == out_feats, "GCN.lin requires hidden_feats == out_feats"

    lane = 128
    hid_pad = max(lane, _round_up(hidden, lane))
    out_pad = max(lane, _round_up(out_feats, lane))

    block_rows = ops["block_rows"]
    n_split = ops["n_split"]
    nbp = ops["blocks_per_split"]
    n_rows_pad = ops["n_rows_pad"]
    n_cols_pad = ops["n_cols_pad"]
    g_pad = ops["g_pad"]
    num_graphs = ops["num_graphs"]

    # ---- StandardScaler().fit_transform(x)  (per-call, matches the torch forward) ----------
    x = x.astype(jnp.float32)
    mean = jnp.mean(x, axis=0, keepdims=True)
    std = jnp.sqrt(jnp.mean((x - mean) ** 2, axis=0, keepdims=True))
    std = jnp.where(std < 10.0 * jnp.finfo(jnp.float32).eps, 1.0, std)     # sklearn zero-scale
    x_std = (x - mean) / std

    # ---- X @ W1 hoisted to one XLA matmul; right D^-1/2 folded into its rows ---------------
    xw = (x_std @ w1) * ops["dinv_nodes"][:, None]
    xw_pad = jnp.zeros((n_cols_pad, hid_pad), jnp.bfloat16).at[:n, :hidden].set(
        xw.astype(jnp.bfloat16))

    # ---- lane-dense padded weights (zero padding -> numerically exact) ---------------------
    b1_pad = jnp.zeros((1, hid_pad), jnp.float32).at[:, :hidden].set(
        b1.reshape(1, hidden).astype(jnp.float32))
    w2_pad = jnp.zeros((hid_pad, out_pad), jnp.bfloat16).at[:hidden, :out_feats].set(
        w2.astype(jnp.bfloat16))

    # ---- explicit VMEM budget ---------------------------------------------------------------
    a_blk_bytes = block_rows * n_cols_pad
    vmem_est = (3 * a_blk_bytes                     # int8 A block, double-buffered (+slack)
                + 2 * a_blk_bytes                   # live bf16 upconvert of the A block
                + 3 * block_rows * lane * 4         # streamed dinv blocks (lane-padded)
                + 2 * n_cols_pad * hid_pad * 2      # resident X W1 (bf16)
                + 2 * n_rows_pad * lane * 2         # resident PA^T (bf16, lane-padded)
                + 2 * hid_pad * out_pad * 2         # W2
                + 2 * 8 * hid_pad * 4               # b1
                + 4 * g_pad * out_pad * 4           # output accumulators
                + 2 * block_rows * max(hid_pad, out_pad) * 4)   # h1 / hw2 temporaries
    vmem_limit = int(min(100 * 2**20, max(32 * 2**20, vmem_est * 5 // 4 + (2 << 20))))

    kernel = partial(_gcn_scan_kernel, block_rows=block_rows, blocks_per_split=nbp)

    grid_spec = pltpu.PrefetchScalarGridSpec(
        num_scalar_prefetch=0,
        grid=(n_split, nbp),
        in_specs=[
            pl.BlockSpec((block_rows, n_cols_pad), lambda s, j: (s * nbp + j, 0)),  # A01 (int8 stream)
            pl.BlockSpec((block_rows, 1), lambda s, j: (s * nbp + j, 0)),           # dinv rows
            pl.BlockSpec((n_cols_pad, hid_pad), lambda s, j: (0, 0)),               # X W1 (resident)
            pl.BlockSpec((n_rows_pad, g_pad), lambda s, j: (0, 0)),                 # PA^T (resident)
            pl.BlockSpec((1, hid_pad), lambda s, j: (0, 0)),                        # b1
            pl.BlockSpec((hid_pad, out_pad), lambda s, j: (0, 0)),                  # W2
        ],
        out_specs=pl.BlockSpec((None, g_pad, out_pad), lambda s, j: (s, 0, 0)),
    )
    partials = pl.pallas_call(
        kernel,
        out_shape=jax.ShapeDtypeStruct((n_split, g_pad, out_pad), jnp.float32),
        grid_spec=grid_spec,
        compiler_params=pltpu.CompilerParams(
            dimension_semantics=("parallel", "arbitrary"),
            vmem_limit_bytes=vmem_limit),
    )(ops["a01"], ops["dinv_rows"], xw_pad, ops["pat"], b1_pad, w2_pad)

    # ---- tiny XLA finalize: sum per-core partials, + b2, final Linear -----------------------
    pooled = jnp.sum(partials, axis=0)[:num_graphs, :out_feats] + b2.reshape(1, -1)
    x3 = pooled @ wl + bl.reshape(1, -1)
    # dropout (eval) is identity; log_softmax is computed but discarded by the torch module.
    return x3


def _reference_forward(x, edge_index, batch, params, num_graphs):
    """Pure-JAX f32 reference (unfused) for a numeric sanity check."""
    w1, b1, w2, b2, wl, bl = params
    n = x.shape[0]
    x = x.astype(jnp.float32)
    mean = x.mean(0)
    std = jnp.sqrt(((x - mean) ** 2).mean(0))
    std = jnp.where(std < 10.0 * jnp.finfo(jnp.float32).eps, 1.0, std)
    xs = (x - mean) / std
    src, dst = edge_index[0], edge_index[1]
    a = jnp.zeros((n, n), jnp.float32).at[dst, src].set(1.0)
    a = a.at[jnp.arange(n), jnp.arange(n)].set(1.0)
    deg = a.sum(1)
    dinv = jnp.where(deg > 0, 1.0 / jnp.sqrt(deg), 0.0)
    an = dinv[:, None] * a * dinv[None, :]
    h = jnp.maximum(an @ (xs @ w1) + b1, 0.0)
    h2 = an @ (h @ w2) + b2
    counts = jnp.zeros((num_graphs,), jnp.float32).at[batch].add(1.0)
    onehot = (batch[None, :] == jnp.arange(num_graphs)[:, None]).astype(jnp.float32)
    p = onehot / jnp.maximum(counts, 1.0)[:, None]
    return (p @ h2) @ wl + bl


if __name__ == "__main__":
    # Small shapes: 16 nodes split into 2 graphs of 8 nodes each.
    # The torch module feeds x2 (out_feats cols) into Linear(hidden_feats, out_feats), which
    # only type-checks when hidden_feats == out_feats, so both are 32.
    N, IN_FEATS, HIDDEN, OUT = 16, 8, 32, 32
    NUM_GRAPHS = 2

    key = jax.random.PRNGKey(0)
    kx, k1, k2, k3 = jax.random.split(key, 4)

    x = jax.random.normal(kx, (N, IN_FEATS), dtype=jnp.float32) * 3.0 + 1.5
    batch = jnp.concatenate([jnp.zeros((8,), jnp.int32), jnp.ones((8,), jnp.int32)])

    # Deterministic edges: an undirected ring inside each 8-node graph.
    src_list, dst_list = [], []
    for g in range(NUM_GRAPHS):
        base = g * 8
        for i in range(8):
            a_node, b_node = base + i, base + (i + 1) % 8
            src_list += [a_node, b_node]
            dst_list += [b_node, a_node]
    edge_index = jnp.array([src_list, dst_list], dtype=jnp.int32)       # (2, 32)

    def init_w(k, fan_in, fan_out):
        scale = jnp.sqrt(2.0 / (fan_in + fan_out))
        return jax.random.normal(k, (fan_in, fan_out), dtype=jnp.float32) * scale

    w1 = init_w(k1, IN_FEATS, HIDDEN)
    b1 = jnp.zeros((1, HIDDEN), jnp.float32)
    w2 = init_w(k2, HIDDEN, OUT)
    b2 = jnp.zeros((1, OUT), jnp.float32)
    wl = init_w(k3, HIDDEN, OUT)          # torch Linear weight is (out, in); stored transposed
    bl = jnp.zeros((1, OUT), jnp.float32)
    params = (w1, b1, w2, b2, wl, bl)

    # Graph operators built once per graph batch (amortized), then the hot-path forward.
    ops = build_graph_operators(edge_index, batch, num_nodes=N, num_graphs=NUM_GRAPHS)
    out = gcn_forward(x, params, ops)
    out = jax.block_until_ready(out)
    assert out.shape == (NUM_GRAPHS, OUT), out.shape
    assert jnp.all(jnp.isfinite(out))

    ref = jax.block_until_ready(_reference_forward(x, edge_index, batch, params, NUM_GRAPHS))
    err = jnp.max(jnp.abs(out - ref))
    assert err < 1e-1 * (1.0 + jnp.max(jnp.abs(ref))), f"max abs err too large: {err}"

    print("KERNEL_OK")
</pallas_src>

<mosaic_0001>
module attributes {stable_mosaic.version = 11 : i64} {
  func.func @_gcn_scan_kernel(%arg0: i32, %arg1: i32, %arg2: memref<32x128xi8, #tpu.memory_space<vmem>>, %arg3: memref<32x1xf32, #tpu.memory_space<vmem>>, %arg4: memref<128x128xbf16, #tpu.memory_space<vmem>>, %arg5: memref<32x8xbf16, #tpu.memory_space<vmem>>, %arg6: memref<1x128xf32, #tpu.memory_space<vmem>>, %arg7: memref<128x128xbf16, #tpu.memory_space<vmem>>, %arg8: memref<1x8x128xf32, #tpu.memory_space<vmem>>) attributes {dimension_semantics = [#tpu.dimension_semantics<parallel>, #tpu.dimension_semantics<arbitrary>], iteration_bounds = array<i64: 1, 1>, scalar_prefetch = 0 : i64, scratch_operands = 0 : i64, tpu.core_type = #tpu.core_type<tc>, window_params = [{transform_indices = @transform_0, window_bounds = array<i64: 32, 128>}, {transform_indices = @transform_1, window_bounds = array<i64: 32, 1>}, {pipeline_mode = #tpu.pipeline_mode<synchronous>, transform_indices = @transform_2, window_bounds = array<i64: 128, 128>}, {pipeline_mode = #tpu.pipeline_mode<synchronous>, transform_indices = @transform_3, window_bounds = array<i64: 32, 8>}, {pipeline_mode = #tpu.pipeline_mode<synchronous>, transform_indices = @transform_4, window_bounds = array<i64: 1, 128>}, {pipeline_mode = #tpu.pipeline_mode<synchronous>, transform_indices = @transform_5, window_bounds = array<i64: 128, 128>}, {transform_indices = @transform_6, window_bounds = array<i64: 1, 8, 128>}]} {
    %c0_i32 = arith.constant 0 : i32
    %0 = arith.cmpi eq, %arg1, %c0_i32 : i32
    %1 = arith.extui %0 : i1 to i32
    %c0_i32_0 = arith.constant 0 : i32
    %2 = arith.cmpi ne, %1, %c0_i32_0 : i32
    scf.if %2 {
      %cst_20 = arith.constant 0.000000e+00 : f32
      %32 = vector.broadcast %cst_20 : f32 to vector<8x128xf32>
      %c0_21 = arith.constant 0 : index
      %c0_22 = arith.constant 0 : index
      %c0_23 = arith.constant 0 : index
      %33 = vector.load %arg8[%c0_21, %c0_22, %c0_23] : memref<1x8x128xf32, #tpu.memory_space<vmem>>, vector<1x8x128xf32>
      %34 = vector.shape_cast %33 : vector<1x8x128xf32> to vector<8x128xf32>
      %35 = vector.shape_cast %32 : vector<8x128xf32> to vector<1x8x128xf32>
      tpu.vector_store %arg8[%c0_21, %c0_22, %c0_23], %35 {strides = array<i32>} : memref<1x8x128xf32, #tpu.memory_space<vmem>>, vector<1x8x128xf32>,
    } else {
    }
    %c1_i32 = arith.constant 1 : i32
    %3 = arith.muli %arg0, %c1_i32 : i32
    %4 = arith.addi %3, %arg1 : i32
    %c32_i32 = arith.constant 32 : i32
    %5 = arith.muli %4, %c32_i32 : i32
    %6 = tpu.assume_multiple %5, 32 : i32
    %c0 = arith.constant 0 : index
    %c0_1 = arith.constant 0 : index
    %7 = vector.load %arg2[%c0, %c0_1] : memref<32x128xi8, #tpu.memory_space<vmem>>, vector<32x128xi8>
    %8 = arith.sitofp %7 : vector<32x128xi8> to vector<32x128xbf16>
    %c0_2 = arith.constant 0 : index
    %c0_3 = arith.constant 0 : index
    %9 = vector.load %arg4[%c0_2, %c0_3] : memref<128x128xbf16, #tpu.memory_space<vmem>>, vector<128x128xbf16>
    %cst = arith.constant dense<0.000000e+00> : vector<32x128xf32>
    %10 = tpu.matmul %8, %9, %cst {dimension_numbers = #tpu.dot_dimension_numbers<[1], [0], [0], [1], [0, 0, 1, 1], [], []>} : vector<32x128xbf16>, vector<128x128xbf16>, vector<32x128xf32> -> vector<32x128xf32>
    %c0_4 = arith.constant 0 : index
    %c0_5 = arith.constant 0 : index
    %11 = vector.load %arg3[%c0_4, %c0_5] : memref<32x1xf32, #tpu.memory_space<vmem>>, vector<32x1xf32>
    %12 = vector.broadcast %11 : vector<32x1xf32> to vector<32x128xf32>
    %13 = arith.mulf %10, %12 : vector<32x128xf32>
    %c0_6 = arith.constant 0 : index
    %c0_7 = arith.constant 0 : index
    %14 = vector.load %arg6[%c0_6, %c0_7] : memref<1x128xf32, #tpu.memory_space<vmem>>, vector<1x128xf32>
    %15 = vector.broadcast %14 : vector<1x128xf32> to vector<32x128xf32>
    %16 = arith.addf %13, %15 : vector<32x128xf32>
    %cst_8 = arith.constant 0.000000e+00 : f32
    %17 = vector.broadcast %cst_8 : f32 to vector<32x128xf32>
    %18 = arith.maximumf %16, %17 : vector<32x128xf32>
    %19 = arith.truncf %18 : vector<32x128xf32> to vector<32x128xbf16>
    %c0_9 = arith.constant 0 : index
    %c0_10 = arith.constant 0 : index
    %20 = vector.load %arg7[%c0_9, %c0_10] : memref<128x128xbf16, #tpu.memory_space<vmem>>, vector<128x128xbf16>
    %cst_11 = arith.constant dense<0.000000e+00> : vector<32x128xf32>
    %21 = tpu.matmul %19, %20, %cst_11 {dimension_numbers = #tpu.dot_dimension_numbers<[1], [0], [0], [1], [0, 0, 1, 1], [], []>} : vector<32x128xbf16>, vector<128x128xbf16>, vector<32x128xf32> -> vector<32x128xf32>
    %22 = arith.index_cast %6 : i32 to index
    %c0_12 = arith.constant 0 : index
    %23 = vector.load %arg5[%22, %c0_12] : memref<32x8xbf16, #tpu.memory_space<vmem>>, vector<32x8xbf16>
    %c0_13 = arith.constant 0 : index
    %c0_14 = arith.constant 0 : index
    %c0_15 = arith.constant 0 : index
    %24 = vector.load %arg8[%c0_13, %c0_14, %c0_15] : memref<1x8x128xf32, #tpu.memory_space<vmem>>, vector<1x8x128xf32>
    %25 = vector.shape_cast %24 : vector<1x8x128xf32> to vector<8x128xf32>
    %26 = arith.truncf %21 : vector<32x128xf32> to vector<32x128xbf16>
    %cst_16 = arith.constant dense<0.000000e+00> : vector<8x128xf32>
    %27 = tpu.matmul %23, %26, %cst_16 {dimension_numbers = #tpu.dot_dimension_numbers<[0], [0], [1], [1], [0, 1, 1, 1], [], []>} : vector<32x8xbf16>, vector<32x128xbf16>, vector<8x128xf32> -> vector<8x128xf32>
    %28 = arith.addf %25, %27 : vector<8x128xf32>
    %c0_17 = arith.constant 0 : index
    %c0_18 = arith.constant 0 : index
    %c0_19 = arith.constant 0 : index
    %29 = vector.load %arg8[%c0_17, %c0_18, %c0_19] : memref<1x8x128xf32, #tpu.memory_space<vmem>>, vector<1x8x128xf32>
    %30 = vector.shape_cast %29 : vector<1x8x128xf32> to vector<8x128xf32>
    %31 = vector.shape_cast %28 : vector<8x128xf32> to vector<1x8x128xf32>
    tpu.vector_store %arg8[%c0_17, %c0_18, %c0_19], %31 {strides = array<i32>} : memref<1x8x128xf32, #tpu.memory_space<vmem>>, vector<1x8x128xf32>,
    return
  }
  func.func @transform_0(%arg0: i32, %arg1: i32) -> (i32, i32) {
    %c1_i32 = arith.constant 1 : i32
    %0 = arith.muli %arg0, %c1_i32 : i32
    %1 = arith.addi %0, %arg1 : i32
    %c0_i32 = arith.constant 0 : i32
    %c0_i32_0 = arith.constant 0 : i32
    return %1, %c0_i32 : i32, i32
  }
  func.func @transform_1(%arg0: i32, %arg1: i32) -> (i32, i32) {
    %c1_i32 = arith.constant 1 : i32
    %0 = arith.muli %arg0, %c1_i32 : i32
    %1 = arith.addi %0, %arg1 : i32
    %c0_i32 = arith.constant 0 : i32
    %c0_i32_0 = arith.constant 0 : i32
    return %1, %c0_i32 : i32, i32
  }
  func.func @transform_2(%arg0: i32, %arg1: i32) -> (i32, i32) {
    %c0_i32 = arith.constant 0 : i32
    %c0_i32_0 = arith.constant 0 : i32
    %c0_i32_1 = arith.constant 0 : i32
    return %c0_i32, %c0_i32_0 : i32, i32
  }
  func.func @transform_3(%arg0: i32, %arg1: i32) -> (i32, i32) {
    %c0_i32 = arith.constant 0 : i32
    %c0_i32_0 = arith.constant 0 : i32
    %c0_i32_1 = arith.constant 0 : i32
    return %c0_i32, %c0_i32_0 : i32, i32
  }
  func.func @transform_4(%arg0: i32, %arg1: i32) -> (i32, i32) {
    %c0_i32 = arith.constant 0 : i32
    %c0_i32_0 = arith.constant 0 : i32
    %c0_i32_1 = arith.constant 0 : i32
    return %c0_i32, %c0_i32_0 : i32, i32
  }
  func.func @transform_5(%arg0: i32, %arg1: i32) -> (i32, i32) {
    %c0_i32 = arith.constant 0 : i32
    %c0_i32_0 = arith.constant 0 : i32
    %c0_i32_1 = arith.constant 0 : i32
    return %c0_i32, %c0_i32_0 : i32, i32
  }
  func.func @transform_6(%arg0: i32, %arg1: i32) -> (i32, i32, i32) {
    %c0_i32 = arith.constant 0 : i32
    %c0_i32_0 = arith.constant 0 : i32
    %c0_i32_1 = arith.constant 0 : i32
    return %arg0, %c0_i32, %c0_i32_0 : i32, i32, i32
  }
}

</mosaic_0001>

<llo_original>
// kernel: tpu_custom_call.1
$region0: #{tpu_custom_call.1}
  #allocation0 [shape = 'u32[]', space=smem, size = 0x4, offset = 0x4, fixed_abs, tag = 'smem constant byte address 0x4 - core index']
  #allocation1 [shape = 'u32[72,128]{1,0:T(1,128)}', space=vmem, size = 0x9000, scoped, tag = 'internal scratch']
  %s0 = inlined_call_operand.vmem [shape: s8[32,128], index: 0, kind: input, shape index: {}]
  %s1 = inlined_call_operand.vmem [shape: f32[32,1], index: 1, kind: input, shape index: {}]
  %s2 = inlined_call_operand.hbm [shape: bf16[128,128], index: 2, kind: input, shape index: {}]
  %s3 = inlined_call_operand.vmem [shape: bf16[32,8], index: 3, kind: input, shape index: {}]
  %s4 = inlined_call_operand.vmem [shape: f32[1,128], index: 4, kind: input, shape index: {}]
  %s5 = inlined_call_operand.hbm [shape: bf16[128,128], index: 5, kind: input, shape index: {}]
  %s6 = inlined_call_operand.hbm [shape: f32[1,8,128], index: 6, kind: output, shape index: {}]
  %s7 = sld [smem:[#allocation0]]
  $region46: #{tpu_custom_call.1} parent=0
    _
  %s9 = ssub.s32 1, %s7
  %s10 = scalar_select 0, %s9, %s7
  $region1: #{tpu_custom_call.1} parent=0
    #allocation2 [shape = 'u8[32768]{0}', space=vmem, size = 0x8000, scoped, tag = 'input window, operand 2, single buffered']
    #allocation3 [shape = 's32[1]{0}', space=sflag, size = 0x4, scoped, tag = 'scoped memory for tpu_custom_call.1']
    #allocation4 [shape = 's32[1]{0}', space=sflag, size = 0x4, scoped, tag = 'scoped memory for tpu_custom_call.1']
    #allocation5 [shape = 'u8[32768]{0}', space=vmem, size = 0x8000, scoped, tag = 'input window, operand 5, single buffered']
    #allocation6 [shape = 's32[1]{0}', space=sflag, size = 0x4, scoped, tag = 'scoped memory for tpu_custom_call.1']
    #allocation7 [shape = 'u8[4096]{0}', space=vmem, size = 0x1000, scoped, tag = 'output window, operand 0, single buffered']
    %11 = vsyncpa [#allocation3], 0
    %12 = vsyncpa [#allocation6], 0
    %13 = vsyncpa [#allocation4], 0
    // Predicated region
    $region2: #{tpu_custom_call.1} parent=1 // pred_check
      _
    $region3: #{tpu_custom_call.1} parent=1 // pred_check_branch
      %15 = sbr.rel (0) target = $region5
    $region4: #{tpu_custom_call.1} parent=1 // pred_region
      %s16 = sadd.s32 0, 0
      %p17 = scmp.lt.s32.totalorder %s16, 0
      %s18 = scalar_select %p17, %s16, 0
      %s19 = smul.addr %s18, 8
      %s20 = scalar_lea.vmem %s0, %s19
      %s21 = sadd.s32 0, 0
    $region5: #{tpu_custom_call.1} parent=1 // pred_fallthru
      _
    // Predicated region
    $region6: #{tpu_custom_call.1} parent=1 // pred_check
      _
    $region7: #{tpu_custom_call.1} parent=1 // pred_check_branch
      %23 = sbr.rel (0) target = $region9
    $region8: #{tpu_custom_call.1} parent=1 // pred_region
      %s24 = sadd.s32 0, 0
      %s25 = smul.u32 4, %s24
      %p26 = scmp.lt.s32.totalorder %s25, 3
      %s27 = scalar_select %p26, %s25, 3
      %s28 = smul.addr %s27, 8
      %s29 = scalar_lea.vmem %s1, %s28
      %s30 = sadd.s32 0, 0
      %s31 = smul.u32 4, %s30
    $region9: #{tpu_custom_call.1} parent=1 // pred_fallthru
      _
    // Predicated region
    $region10: #{tpu_custom_call.1} parent=1 // pred_check
      _
    $region11: #{tpu_custom_call.1} parent=1 // pred_check_branch
      %33 = sbr.rel (0) target = $region13
    $region12: #{tpu_custom_call.1} parent=1 // pred_region
      %35 = vsyncadd [#allocation3], 0
      %s36 = sshll.u32 %s2, 4
      %s37 = int_to_ptr.hbm [resolvable:$true] %s36
      %s38 = sshll.u32 [#allocation2], 4
      %s39 = int_to_ptr.vmem [resolvable:$true] %s38
      %44 = dma.hbm_to_vmem [thread:$0]  %s37, 1024, %s39, [#allocation3], 64, 64, 4
    $region13: #{tpu_custom_call.1} parent=1 // pred_fallthru
      _
    // Predicated region
    $region14: #{tpu_custom_call.1} parent=1 // pred_check
      _
    $region15: #{tpu_custom_call.1} parent=1 // pred_check_branch
      %46 = sbr.rel (0) target = $region17
    $region16: #{tpu_custom_call.1} parent=1 // pred_region
      _
    $region17: #{tpu_custom_call.1} parent=1 // pred_fallthru
      _
    // Predicated region
    $region18: #{tpu_custom_call.1} parent=1 // pred_check
      _
    $region19: #{tpu_custom_call.1} parent=1 // pred_check_branch
      %48 = sbr.rel (0) target = $region21
    $region20: #{tpu_custom_call.1} parent=1 // pred_region
      _
    $region21: #{tpu_custom_call.1} parent=1 // pred_fallthru
      _
    // Predicated region
    $region22: #{tpu_custom_call.1} parent=1 // pred_check
      _
    $region23: #{tpu_custom_call.1} parent=1 // pred_check_branch
      %50 = sbr.rel (0) target = $region25
    $region24: #{tpu_custom_call.1} parent=1 // pred_region
      %52 = vsyncadd [#allocation6], 0
      %s53 = sshll.u32 %s5, 4
      %s54 = int_to_ptr.hbm [resolvable:$true] %s53
      %s55 = sshll.u32 [#allocation5], 4
      %s56 = int_to_ptr.vmem [resolvable:$true] %s55
      %61 = dma.hbm_to_vmem [thread:$0]  %s54, 1024, %s56, [#allocation6], 64, 64, 4
    $region25: #{tpu_custom_call.1} parent=1 // pred_fallthru
      _
    // Predicated region
    $region26: #{tpu_custom_call.1} parent=1 // pred_check
      _
    $region27: #{tpu_custom_call.1} parent=1 // pred_check_branch
      %63 = sbr.rel (0) target = $region29
    $region28: #{tpu_custom_call.1} parent=1 // pred_region
      %65 = dma.done [#allocation3], 1024
    $region29: #{tpu_custom_call.1} parent=1 // pred_fallthru
      _
    // Predicated region
    $region30: #{tpu_custom_call.1} parent=1 // pred_check
      _
    $region31: #{tpu_custom_call.1} parent=1 // pred_check_branch
      %67 = sbr.rel (0) target = $region33
    $region32: #{tpu_custom_call.1} parent=1 // pred_region
      %69 = dma.done [#allocation6], 1024
    $region33: #{tpu_custom_call.1} parent=1 // pred_fallthru
      _
    %s70 = sadd.s32 0, 0
    %p71 = scmp.lt.s32.totalorder %s70, 0
    %s72 = scalar_select %p71, %s70, 0
    %s73 = smul.addr %s72, 8
    %s74 = scalar_lea.vmem %s0, %s73
    %s75 = sadd.s32 0, 0
    %s76 = smul.u32 4, %s75
    %p77 = scmp.lt.s32.totalorder %s76, 3
    %s78 = scalar_select %p77, %s76, 3
    %s79 = smul.addr %s78, 8
    %s80 = scalar_lea.vmem %s1, %s79
    %s81 = sadd.s32 0, 0
    %p82 = scmp.lt.s32.totalorder %s81, 0
    %s83 = scalar_select %p82, %s81, 0
    %s84 = smul.addr %s83, 8
    %s85 = scalar_lea.vmem %s0, %s84
    %s86 = sadd.s32 0, 0
    %s87 = sadd.s32 0, 0
    %s88 = smul.u32 4, %s87
    %p89 = scmp.lt.s32.totalorder %s88, 3
    %s90 = scalar_select %p89, %s88, 3
    %s91 = smul.addr %s90, 8
    %s92 = scalar_lea.vmem %s1, %s91
    %s93 = sadd.s32 0, 0
    %s94 = smul.u32 4, %s93
    %p96 = scmp.eq.s32.totalorder 0, 0
    // Predicated region
    $region34: #{tpu_custom_call.1} parent=1 // pred_check
      %p97 = pneg %p96
    $region35: #{tpu_custom_call.1} parent=1 // pred_check_branch
      %99 = sbr.rel (%p97) target = $region37
    $region36: #{tpu_custom_call.1} parent=1 // pred_region
      %100 = vst [vmem:[#allocation7] sm:$0xff] 0.0
    $region37: #{tpu_custom_call.1} parent=1 // pred_fallthru
      _
    %s101 = sadd.s32 0, 0
    %s102 = smul.u32 %s101, 32
    %v103 = vld [vmem:[%s85] sm:$0xff]
    %v104 = vunpack.c.0.s8 %v103
    %v105 = vunpack.c.1.s8 %v103
    %v106 = vunpack.c.2.s8 %v103
    %v107 = vunpack.c.3.s8 %v103
    %v108 = vcvt.s32.f32 %v104
    %v109 = vcvt.s32.f32 %v105
    %v110 = vcvt.s32.f32 %v106
    %v111 = vcvt.s32.f32 %v107
    %v112 = vpack.c.bf16 %v109, %v108
    %v113 = vpack.c.bf16 %v111, %v110
    %v114 = vld [vmem:[#allocation2] sm:$0xf]
    %v115 = vld [vmem:[#allocation2 + $0x4] sm:$0xf]
    %v116 = vld [vmem:[#allocation2 + $0x8] sm:$0xf]
    %v117 = vld [vmem:[#allocation2 + $0xc] sm:$0xf]
    %v118 = vld [vmem:[#allocation2 + $0x10] sm:$0xf]
    %v119 = vld [vmem:[#allocation2 + $0x14] sm:$0xf]
    %v120 = vld [vmem:[#allocation2 + $0x18] sm:$0xf]
    %v121 = vld [vmem:[#allocation2 + $0x1c] sm:$0xf]
    %v122 = vld [vmem:[#allocation2 + $0x20] sm:$0xf]
    %v123 = vld [vmem:[#allocation2 + $0x24] sm:$0xf]
    %v124 = vld [vmem:[#allocation2 + $0x28] sm:$0xf]
    %v125 = vld [vmem:[#allocation2 + $0x2c] sm:$0xf]
    %v126 = vld [vmem:[#allocation2 + $0x30] sm:$0xf]
    %v127 = vld [vmem:[#allocation2 + $0x34] sm:$0xf]
    %v128 = vld [vmem:[#allocation2 + $0x38] sm:$0xf]
    %v129 = vld [vmem:[#allocation2 + $0x3c] sm:$0xf]
    %v146 = vunpack.c.l.b16 %v114
    %v147 = vunpack.c.l.b16 %v115
    %v148 = vunpack.c.l.b16 %v116
    %v149 = vunpack.c.l.b16 %v117
    %v150 = vunpack.c.l.b16 %v118
    %v151 = vunpack.c.l.b16 %v119
    %v152 = vunpack.c.l.b16 %v120
    %v153 = vunpack.c.l.b16 %v121
    %v154 = vunpack.c.l.b16 %v122
    %v155 = vunpack.c.l.b16 %v123
    %v156 = vunpack.c.l.b16 %v124
    %v157 = vunpack.c.l.b16 %v125
    %v158 = vunpack.c.l.b16 %v126
    %v159 = vunpack.c.l.b16 %v127
    %v160 = vunpack.c.l.b16 %v128
    %v161 = vunpack.c.l.b16 %v129
    %v162 = vpack.c.b16 %v147, %v146
    %v163 = vpack.c.b16 %v149, %v148
    %v164 = vpack.c.b16 %v151, %v150
    %v165 = vpack.c.b16 %v153, %v152
    %v166 = vpack.c.b16 %v155, %v154
    %v167 = vpack.c.b16 %v157, %v156
    %v168 = vpack.c.b16 %v159, %v158
    %v169 = vpack.c.b16 %v161, %v160
    %178 = vmatpush.bf16.msra.mxu0 %v169
    %179 = vmatpush.bf16.msra.mxu0 %v168
    %180 = vmatpush.bf16.msra.mxu0 %v167
    %181 = vmatpush.bf16.msra.mxu0 %v166
    %182 = vmatpush.bf16.msra.mxu0 %v165
    %183 = vmatpush.bf16.msra.mxu0 %v164
    %184 = vmatpush.bf16.msra.mxu0 %v163
    %185 = vmatpush.bf16.msra.mxu0 %v162
    %186 = vmatmul.bf16.gmra.mxu0 %v112
    %v187 = vpop.f32.mrf.mxu0
    %v188 = vadd.f32 0.0, %v187
    %v189 = vpop.f32.mrf.mxu0
    %v190 = vadd.f32 0.0, %v189
    %191 = vmatmul.bf16.gmra.mxu0 %v113
    %v192 = vpop.f32.mrf.mxu0
    %v193 = vadd.f32 0.0, %v192
    %v194 = vpop.f32.mrf.mxu0
    %v195 = vadd.f32 0.0, %v194
    %196 = vdwg.mxu0
    %v197 = vld [vmem:[%s92] sm:$0xff]
    %v198 = vld [vmem:[%s92 + $0x8] sm:$0xff]
    %v199 = vld [vmem:[%s92 + $0x10] sm:$0xff]
    %v200 = vld [vmem:[%s92 + $0x18] sm:$0xff]
    %202 = vset.pattern.permute.xlu0 0
    %203 = vperm.xlu0 %202, %v197
    %v204 = vpop.permute.xlu0 %203
    %207 = vset.pattern.permute.xlu0 0
    %208 = vperm.xlu0 %207, %v198
    %v209 = vpop.permute.xlu0 %208
    %212 = vset.pattern.permute.xlu0 0
    %213 = vperm.xlu0 %212, %v199
    %v214 = vpop.permute.xlu0 %213
    %217 = vset.pattern.permute.xlu0 0
    %218 = vperm.xlu0 %217, %v200
    %v219 = vpop.permute.xlu0 %218
    %v221 = vmul.f32 %v188, %v204
    %v222 = vmul.f32 %v190, %v209
    %v223 = vmul.f32 %v193, %v214
    %v224 = vmul.f32 %v195, %v219
    %v225 = vld [vmem:[%s4] sm:$0x1]
    %v227 = vperm.slane %v225, 0
    %v229 = vadd.f32 %v221, %v227
    %v230 = vadd.f32 %v222, %v227
    %v231 = vadd.f32 %v223, %v227
    %v232 = vadd.f32 %v224, %v227
    %v233 = vmax.f32 %v229, 0.0
    %v234 = vmax.f32 %v230, 0.0
    %v235 = vmax.f32 %v231, 0.0
    %v236 = vmax.f32 %v232, 0.0
    %v237 = vpack.c.bf16 %v234, %v233
    %v238 = vpack.c.bf16 %v236, %v235
    %v239 = vld [vmem:[#allocation5] sm:$0xf]
    %v240 = vld [vmem:[#allocation5 + $0x4] sm:$0xf]
    %v241 = vld [vmem:[#allocation5 + $0x8] sm:$0xf]
    %v242 = vld [vmem:[#allocation5 + $0xc] sm:$0xf]
    %v243 = vld [vmem:[#allocation5 + $0x10] sm:$0xf]
    %v244 = vld [vmem:[#allocation5 + $0x14] sm:$0xf]
    %v245 = vld [vmem:[#allocation5 + $0x18] sm:$0xf]
    %v246 = vld [vmem:[#allocation5 + $0x1c] sm:$0xf]
    %v247 = vld [vmem:[#allocation5 + $0x20] sm:$0xf]
    %v248 = vld [vmem:[#allocation5 + $0x24] sm:$0xf]
    %v249 = vld [vmem:[#allocation5 + $0x28] sm:$0xf]
    %v250 = vld [vmem:[#allocation5 + $0x2c] sm:$0xf]
    %v251 = vld [vmem:[#allocation5 + $0x30] sm:$0xf]
    %v252 = vld [vmem:[#allocation5 + $0x34] sm:$0xf]
    %v253 = vld [vmem:[#allocation5 + $0x38] sm:$0xf]
    %v254 = vld [vmem:[#allocation5 + $0x3c] sm:$0xf]
    %v271 = vunpack.c.l.b16 %v239
    %v272 = vunpack.c.l.b16 %v240
    %v273 = vunpack.c.l.b16 %v241
    %v274 = vunpack.c.l.b16 %v242
    %v275 = vunpack.c.l.b16 %v243
    %v276 = vunpack.c.l.b16 %v244
    %v277 = vunpack.c.l.b16 %v245
    %v278 = vunpack.c.l.b16 %v246
    %v279 = vunpack.c.l.b16 %v247
    %v280 = vunpack.c.l.b16 %v248
    %v281 = vunpack.c.l.b16 %v249
    %v282 = vunpack.c.l.b16 %v250
    %v283 = vunpack.c.l.b16 %v251
    %v284 = vunpack.c.l.b16 %v252
    %v285 = vunpack.c.l.b16 %v253
    %v286 = vunpack.c.l.b16 %v254
    %v287 = vpack.c.b16 %v272, %v271
    %v288 = vpack.c.b16 %v274, %v273
    %v289 = vpack.c.b16 %v276, %v275
    %v290 = vpack.c.b16 %v278, %v277
    %v291 = vpack.c.b16 %v280, %v279
    %v292 = vpack.c.b16 %v282, %v281
    %v293 = vpack.c.b16 %v284, %v283
    %v294 = vpack.c.b16 %v286, %v285
    %303 = vmatpush.bf16.msra.mxu0 %v294
    %304 = vmatpush.bf16.msra.mxu0 %v293
    %305 = vmatpush.bf16.msra.mxu0 %v292
    %306 = vmatpush.bf16.msra.mxu0 %v291
    %307 = vmatpush.bf16.msra.mxu0 %v290
    %308 = vmatpush.bf16.msra.mxu0 %v289
    %309 = vmatpush.bf16.msra.mxu0 %v288
    %310 = vmatpush.bf16.msra.mxu0 %v287
    %311 = vmatmul.bf16.gmra.mxu0 %v237
    %v312 = vpop.f32.mrf.mxu0
    %v313 = vadd.f32 0.0, %v312
    %v314 = vpop.f32.mrf.mxu0
    %v315 = vadd.f32 0.0, %v314
    %316 = vmatmul.bf16.gmra.mxu0 %v238
    %v317 = vpop.f32.mrf.mxu0
    %v318 = vadd.f32 0.0, %v317
    %v319 = vpop.f32.mrf.mxu0
    %v320 = vadd.f32 0.0, %v319
    %321 = vdwg.mxu0
    %s322 = sshra.s32 %s102, 3
    %s323 = sand.u32 %s102, 7
    %s324 = smul.addr %s322, 4
    %s325 = scalar_lea.vmem %s3, %s324
    %v326 = vld [vmem:[%s325] sm:$0xf]
    %v327 = vld [vmem:[%s325 + $0x4] sm:$0xf]
    %v328 = vld [vmem:[%s325 + $0x8] sm:$0xf]
    %v329 = vld [vmem:[%s325 + $0xc] sm:$0xf]
    %v330 = vld [vmem:[#allocation7] sm:$0xff]
    %v331 = vpack.c.bf16 %v315, %v313
    %v332 = vpack.c.bf16 %v320, %v318
    %v337 = vunpack.c.l.b16 %v326
    %v338 = vunpack.c.l.b16 %v327
    %v339 = vunpack.c.l.b16 %v328
    %v340 = vunpack.c.l.b16 %v329
    %v341 = vpack.c.b16 %v338, %v337
    %v342 = vpack.c.b16 %v340, %v339
    %345 = vxpose.xlu0.c.b16.start [1/8] %v341, 128
    %346 = vxpose.xlu0.c.b16.cont [2/8] %v342, 128
    %347 = vxpose.xlu0.c.b16.cont [3/8] 0, 128
    %348 = vxpose.xlu0.c.b16.cont [4/8] 0, 128
    %349 = vxpose.xlu0.c.b16.cont [5/8] 0, 128
    %350 = vxpose.xlu0.c.b16.cont [6/8] 0, 128
    %351 = vxpose.xlu0.c.b16.cont [7/8] 0, 128
    %352 = vxpose.xlu0.c.b16.end [8/8] 0, 128
    %v353 = vpop.trf.xlu0
    %v354 = vpop.trf.xlu0
    %v355 = vpop.trf.xlu0
    %v356 = vpop.trf.xlu0
    %v357 = vpop.trf.xlu0
    %v358 = vpop.trf.xlu0
    %v359 = vpop.trf.xlu0
    %v360 = vpop.trf.xlu0
    %vm361 = vcmask 261120
    %v363 = vsel %vm361, %v353, 0
    %365 = vmatpush.bf16.msra.mxu0 0
    %366 = vmatpush.bf16.msra.mxu0 0
    %367 = vmatpush.bf16.msra.mxu0 0
    %368 = vmatpush.bf16.msra.mxu0 0
    %369 = vmatpush.bf16.msra.mxu0 0
    %370 = vmatpush.bf16.msra.mxu0 0
    %371 = vmatpush.bf16.msra.mxu0 %v332
    %372 = vmatpush.bf16.msra.mxu0 %v331
    %373 = vmatmul.bf16.gmra.mxu0 %v363
    %v374 = vpop.f32.mrf.mxu0
    %v375 = vadd.f32 0.0, %v374
    %v376 = vpop.f32.mrf.mxu0
    %377 = vdwg.mxu0
    %v378 = vadd.f32 %v330, %v375
    %379 = vst [vmem:[#allocation7] sm:$0xff] %v378
    // Predicated region
    $region38: #{tpu_custom_call.1} parent=1 // pred_check
      _
    $region39: #{tpu_custom_call.1} parent=1 // pred_check_branch
      %381 = sbr.rel (0) target = $region41
    $region40: #{tpu_custom_call.1} parent=1 // pred_region
      %383 = vsyncadd [#allocation4], 0
      %s385 = sshll.u32 [#allocation7], 4
      %s386 = int_to_ptr.vmem [resolvable:$true] %s385
      %s387 = sshll.u32 %s6, 4
      %s388 = int_to_ptr.hbm [resolvable:$true] %s387
      %390 = dma.vmem_to_hbm [thread:$0]  %s386, 128, %s388, [#allocation4]
    $region41: #{tpu_custom_call.1} parent=1 // pred_fallthru
      _
    // Predicated region
    $region42: #{tpu_custom_call.1} parent=1 // pred_check
      _
    $region43: #{tpu_custom_call.1} parent=1 // pred_check_branch
      %392 = sbr.rel (0) target = $region45
    $region44: #{tpu_custom_call.1} parent=1 // pred_region
      %394 = dma.done [#allocation4], 128
    $region45: #{tpu_custom_call.1} parent=1 // pred_fallthru
      _
    %395 = vsyncpa [#allocation3], 1
    %396 = vsyncpa [#allocation6], 1
    %397 = vsyncpa [#allocation4], 1

</llo_original>
